<compile_context>
chip_gen: v7x
topology: tpu7x:2x2x1
jax: 0.10.0
libtpu: 0.0.40
codegen_flags: <defaults>
</compile_context>

<pallas_src>
import numpy as np
import jax
import jax.numpy as jnp
from jax.experimental import pallas as pl
from jax.experimental.pallas import tpu as pltpu


# ------------------------------------------------------- row-tiled matmul kernels (MXU-friendly)
def gates_kernel(x_ref, w_ref, b_ref, out_ref):
    # x: (tm, Din) f32, w: (Din, 8H) bf16, b: (1, 8H) f32 -> gates_x for both directions.
    x = x_ref[...].astype(jnp.bfloat16)
    out_ref[...] = (jnp.dot(x, w_ref[...], preferred_element_type=jnp.float32)
                    + b_ref[...])


def emission_kernel(h_ref, w_ref, b_ref, out_ref):
    # hidden2ta linear + 2-class softmax in closed form (sigmoid of logit difference).
    h = h_ref[...].astype(jnp.bfloat16)
    logits = jnp.dot(h, w_ref[...], preferred_element_type=jnp.float32) + b_ref[...]
    p1 = jax.nn.sigmoid(logits[:, 1:2] - logits[:, 0:1])
    out_ref[...] = jnp.concatenate([1.0 - p1, p1], axis=-1)


def _row_tiled_matmul(kernel, x2d, w, b, n_out, max_tile=512):
    """Row-tiled pallas_call for (M, Din) @ (Din, n_out) + b style kernels."""
    M, Din = x2d.shape
    tm = M if M <= 2 * max_tile else max_tile
    Mp = pl.cdiv(M, tm) * tm
    xp = jnp.pad(x2d, ((0, Mp - M), (0, 0))) if Mp != M else x2d
    out = pl.pallas_call(
        kernel,
        out_shape=jax.ShapeDtypeStruct((Mp, n_out), jnp.float32),
        grid=(Mp // tm,),
        in_specs=[
            pl.BlockSpec((tm, Din), lambda i: (i, 0)),
            pl.BlockSpec((Din, n_out), lambda i: (0, 0)),
            pl.BlockSpec((1, n_out), lambda i: (0, 0)),
        ],
        out_specs=pl.BlockSpec((tm, n_out), lambda i: (i, 0)),
        compiler_params=pltpu.CompilerParams(dimension_semantics=("parallel",)),
    )(xp, w, b)
    return out[:M] if Mp != M else out


# --------------------------------------------------- fused bidirectional LSTM recurrence kernel
def bilstm_recurrence_kernel(gates_ref, whhf_ref, whhb_ref, out_ref):
    # gates_ref: (T, B, 8H) f32 precomputed x@W_ih + b for [forward | backward] directions.
    # whh*_ref:  (H, 4H) bf16 recurrent weights.  out_ref: (T, B, 2H) f32 = [h_fwd | h_bwd].
    T, B, _ = gates_ref.shape
    H = whhf_ref.shape[0]
    G = 4 * H

    whh_f = whhf_ref[...]   # loaded once, reused across all timesteps
    whh_b = whhb_ref[...]

    def cell(gx, h, c, whh):
        gates = gx + jnp.dot(h.astype(jnp.bfloat16), whh,
                             preferred_element_type=jnp.float32)   # (B, 4H)
        i = jax.nn.sigmoid(gates[:, 0 * H:1 * H])
        f = jax.nn.sigmoid(gates[:, 1 * H:2 * H])
        g = jnp.tanh(gates[:, 2 * H:3 * H])
        o = jax.nn.sigmoid(gates[:, 3 * H:4 * H])
        c_new = f * c + i * g
        h_new = o * jnp.tanh(c_new)
        return h_new, c_new

    def step(t, carry):
        h_f, c_f, h_b, c_b = carry
        tb = T - 1 - t
        gx_f = gates_ref[pl.ds(t, 1), :, 0:G][0]          # (B, 4H) forward gates at t
        gx_b = gates_ref[pl.ds(tb, 1), :, G:2 * G][0]     # (B, 4H) backward gates at T-1-t
        h_f, c_f = cell(gx_f, h_f, c_f, whh_f)
        h_b, c_b = cell(gx_b, h_b, c_b, whh_b)
        out_ref[pl.ds(t, 1), :, 0:H] = h_f[None]
        out_ref[pl.ds(tb, 1), :, H:2 * H] = h_b[None]
        return (h_f, c_f, h_b, c_b)

    z = jnp.zeros((B, H), jnp.float32)
    jax.lax.fori_loop(0, T, step, (z, z, z, z))


def bilstm_recurrence_pallas(gates, whh_f, whh_b):
    T, B, _ = gates.shape
    H = whh_f.shape[0]
    # TODO(synk): for very long sequences chunk T so the (T,B,4H)x2 gate slab fits VMEM
    # (re-derive the chunk for v7x's 64 MiB); single-shot is fine at these sizes.
    return pl.pallas_call(
        bilstm_recurrence_kernel,
        out_shape=jax.ShapeDtypeStruct((T, B, 2 * H), jnp.float32),
    )(gates, whh_f, whh_b)


def bilstm(x, lstm_params):
    """Multi-layer bidirectional LSTM. x: (T, B, E) -> (T, B, 2H). B must be a multiple of 8."""
    T, B, _ = x.shape
    inp = x
    for (wih_cat, b_cat, whh_f, whh_b) in lstm_params:
        Din = inp.shape[-1]
        H = whh_f.shape[0]
        # Hoisted input projection for both directions: one big MXU matmul outside the recurrence.
        gates = _row_tiled_matmul(gates_kernel, inp.reshape(T * B, Din),
                                  wih_cat, b_cat, 8 * H)
        inp = bilstm_recurrence_pallas(gates.reshape(T, B, 8 * H), whh_f, whh_b)
    return inp
    # TODO(synk): nn.LSTM inter-layer dropout is a training-mode op; inference (identity) semantics used.


def emission_pallas(hidden2d, w, b):
    """(T*B, 2H) -> softmax(hidden @ w + b) over 2 tags: (T*B, 2)."""
    return _row_tiled_matmul(emission_kernel, hidden2d, w, b, 2)


# ----------------------------------------------------------------------------------- CRF (tags=2)
def crf_log_likelihood(emissions, tags, mask, start_trans, end_trans, trans):
    """torchcrf semantics, batch_first=False, reduction='sum'.
    emissions (T,B,K) float32, tags (T,B) int32, mask (T,B) float32."""
    T, B, K = emissions.shape
    barange = jnp.arange(B)

    # numerator: score of the given tag sequence
    score = start_trans[tags[0]] + emissions[0, barange, tags[0]]

    def num_step(s, inp):
        em_t, tag_prev, tag_t, m_t = inp
        step = trans[tag_prev, tag_t] + em_t[barange, tag_t]
        return s + step * m_t, None

    score, _ = jax.lax.scan(
        num_step, score, (emissions[1:], tags[:-1], tags[1:], mask[1:]))
    seq_ends = mask.sum(0).astype(jnp.int32) - 1
    last_tags = tags[seq_ends, barange]
    numerator = score + end_trans[last_tags]

    # denominator: forward algorithm (log partition)
    alpha = start_trans[None, :] + emissions[0]          # (B, K)

    def den_step(a, inp):
        em_t, m_t = inp
        nxt = a[:, :, None] + trans[None, :, :] + em_t[:, None, :]
        nxt = jax.nn.logsumexp(nxt, axis=1)
        a = jnp.where(m_t[:, None] > 0, nxt, a)
        return a, None

    alpha, _ = jax.lax.scan(den_step, alpha, (emissions[1:], mask[1:]))
    denominator = jax.nn.logsumexp(alpha + end_trans[None, :], axis=1)

    return jnp.sum(numerator - denominator)              # reduction='sum'


# ------------------------------------------------------------------------------------- full model
def lstm_crf_forward(params, seq_emb, tags, masks):
    # mirror the PyTorch forward (including its squeeze/permute quirks)
    tags = jnp.squeeze(jnp.transpose(tags, (1, 0, 2))).astype(jnp.int32)   # (T, B)
    masks = jnp.squeeze(masks).astype(jnp.float32)                         # (T, B) (squeezed, not permuted)
    seq_emb = jnp.transpose(seq_emb, (1, 0, 2))                            # (T, B, E)

    T, B, _ = seq_emb.shape
    Bp = ((B + 7) // 8) * 8                                                # pad batch to 8 sublanes
    x = seq_emb if Bp == B else jnp.pad(seq_emb, ((0, 0), (0, Bp - B), (0, 0)))

    hidden = bilstm(x, params["lstm"])                                     # (T, Bp, 2H)
    D = hidden.shape[-1]
    emission = emission_pallas(hidden.reshape(T * Bp, D),
                               params["lin_w"], params["lin_b"]).reshape(T, Bp, 2)
    emission = emission[:, :B]                                             # drop batch padding

    likelihood = crf_log_likelihood(
        emission, tags, masks,
        params["crf_start"], params["crf_end"], params["crf_trans"])
    return -likelihood


def init_params(key, embedding_dim, hidden_dim, n_layers, num_tags=2):
    H = hidden_dim
    k = 1.0 / np.sqrt(H)
    keys = iter(jax.random.split(key, 8 * n_layers + 8))
    u = lambda shp, lim: jax.random.uniform(next(keys), shp, jnp.float32, -lim, lim)

    lstm = []
    in_dim = embedding_dim
    for _ in range(n_layers):
        wih_f = u((in_dim, 4 * H), k)                    # transposed vs PyTorch (4H, in)
        whh_f = u((H, 4 * H), k)
        b_f = u((1, 4 * H), k) + u((1, 4 * H), k)        # b_ih + b_hh
        wih_b = u((in_dim, 4 * H), k)
        whh_b = u((H, 4 * H), k)
        b_b = u((1, 4 * H), k) + u((1, 4 * H), k)
        # both directions' input projections packed into one matmul; weights stored bf16
        wih_cat = jnp.concatenate([wih_f, wih_b], axis=1).astype(jnp.bfloat16)   # (in, 8H)
        b_cat = jnp.concatenate([b_f, b_b], axis=1)                              # (1, 8H) f32
        lstm.append((wih_cat, b_cat,
                     whh_f.astype(jnp.bfloat16), whh_b.astype(jnp.bfloat16)))
        in_dim = 2 * H

    k2 = 1.0 / np.sqrt(2 * H)
    return {
        "lstm": lstm,
        "lin_w": u((2 * H, num_tags), k2).astype(jnp.bfloat16),
        "lin_b": u((1, num_tags), k2),
        "crf_start": u((num_tags,), 0.1),
        "crf_end": u((num_tags,), 0.1),
        "crf_trans": u((num_tags, num_tags), 0.1),
    }


if __name__ == "__main__":
    embedding_dim, hidden_dim, n_layers = 16, 32, 2
    batch, seq_len = 4, 8

    root = jax.random.PRNGKey(0)
    kp, kx, kt = jax.random.split(root, 3)

    params = init_params(kp, embedding_dim, hidden_dim, n_layers)
    seq_emb = jax.random.normal(kx, (batch, seq_len, embedding_dim), jnp.float32)
    tags = jax.random.randint(kt, (batch, seq_len, 1), 0, 2, jnp.int32)
    masks = jnp.ones((seq_len, batch, 1), jnp.int32)   # squeezed (not permuted) like the torch code

    loss = jax.jit(lstm_crf_forward)(params, seq_emb, tags, masks)
    jax.block_until_ready(loss)
    assert loss.shape == () and jnp.isfinite(loss)
    print("KERNEL_OK")
</pallas_src>

<mosaic_0001>
module attributes {stable_mosaic.version = 11 : i64} {
  func.func @bilstm_recurrence_kernel(%arg0: memref<8x8x256xf32, #tpu.memory_space<vmem>>, %arg1: memref<32x128xbf16, #tpu.memory_space<vmem>>, %arg2: memref<32x128xbf16, #tpu.memory_space<vmem>>, %arg3: memref<8x8x64xf32, #tpu.memory_space<vmem>>) attributes {dimension_semantics = [], scalar_prefetch = 0 : i64, scratch_operands = 0 : i64, tpu.core_type = #tpu.core_type<tc>} {
    %c0 = arith.constant 0 : index
    %c0_0 = arith.constant 0 : index
    %0 = vector.load %arg1[%c0, %c0_0] : memref<32x128xbf16, #tpu.memory_space<vmem>>, vector<32x128xbf16>
    %c0_1 = arith.constant 0 : index
    %c0_2 = arith.constant 0 : index
    %1 = vector.load %arg2[%c0_1, %c0_2] : memref<32x128xbf16, #tpu.memory_space<vmem>>, vector<32x128xbf16>
    %cst = arith.constant 0.000000e+00 : f32
    %2 = vector.broadcast %cst : f32 to vector<8x32xf32>
    %c0_i32 = arith.constant 0 : i32
    %c8_i32 = arith.constant 8 : i32
    %3 = arith.addi %c0_i32, %c8_i32 : i32
    %c1_i32 = arith.constant 1 : i32
    %4:4 = scf.for %arg4 = %c0_i32 to %3 step %c1_i32 iter_args(%arg5 = %2, %arg6 = %2, %arg7 = %2, %arg8 = %2) -> (vector<8x32xf32>, vector<8x32xf32>, vector<8x32xf32>, vector<8x32xf32>)  : i32 {
      %c7_i32 = arith.constant 7 : i32
      %5 = arith.subi %c7_i32, %arg4 : i32
      %6 = arith.index_cast %arg4 : i32 to index
      %c0_4 = arith.constant 0 : index
      %c0_5 = arith.constant 0 : index
      %7 = vector.load %arg0[%6, %c0_4, %c0_5] : memref<8x8x256xf32, #tpu.memory_space<vmem>>, vector<1x8x128xf32>
      %8 = vector.shape_cast %7 : vector<1x8x128xf32> to vector<8x128xf32>
      %9 = arith.index_cast %5 : i32 to index
      %c0_6 = arith.constant 0 : index
      %c128 = arith.constant 128 : index
      %10 = vector.load %arg0[%9, %c0_6, %c128] : memref<8x8x256xf32, #tpu.memory_space<vmem>>, vector<1x8x128xf32>
      %11 = vector.shape_cast %10 : vector<1x8x128xf32> to vector<8x128xf32>
      %12 = arith.truncf %arg5 : vector<8x32xf32> to vector<8x32xbf16>
      %cst_7 = arith.constant dense<0.000000e+00> : vector<8x128xf32>
      %13 = tpu.matmul %12, %0, %cst_7 {dimension_numbers = #tpu.dot_dimension_numbers<[1], [0], [0], [1], [0, 0, 1, 1], [], []>} : vector<8x32xbf16>, vector<32x128xbf16>, vector<8x128xf32> -> vector<8x128xf32>
      %14 = arith.addf %8, %13 : vector<8x128xf32>
      %15 = vector.extract_strided_slice %14 {offsets = [0, 0], sizes = [8, 32], strides = [1, 1]} : vector<8x128xf32> to vector<8x32xf32>
      %16 = arith.negf %15 : vector<8x32xf32>
      %17 = math.exp %16 : vector<8x32xf32>
      %cst_8 = arith.constant 1.000000e+00 : f32
      %18 = vector.broadcast %cst_8 : f32 to vector<8x32xf32>
      %19 = arith.addf %18, %17 : vector<8x32xf32>
      %20 = arith.divf %18, %19 : vector<8x32xf32>
      %21 = vector.extract_strided_slice %14 {offsets = [0, 32], sizes = [8, 32], strides = [1, 1]} : vector<8x128xf32> to vector<8x32xf32>
      %22 = arith.negf %21 : vector<8x32xf32>
      %23 = math.exp %22 : vector<8x32xf32>
      %cst_9 = arith.constant 1.000000e+00 : f32
      %24 = vector.broadcast %cst_9 : f32 to vector<8x32xf32>
      %25 = arith.addf %24, %23 : vector<8x32xf32>
      %26 = arith.divf %24, %25 : vector<8x32xf32>
      %27 = vector.extract_strided_slice %14 {offsets = [0, 64], sizes = [8, 32], strides = [1, 1]} : vector<8x128xf32> to vector<8x32xf32>
      %28 = math.tanh %27 : vector<8x32xf32>
      %29 = vector.extract_strided_slice %14 {offsets = [0, 96], sizes = [8, 32], strides = [1, 1]} : vector<8x128xf32> to vector<8x32xf32>
      %30 = arith.negf %29 : vector<8x32xf32>
      %31 = math.exp %30 : vector<8x32xf32>
      %cst_10 = arith.constant 1.000000e+00 : f32
      %32 = vector.broadcast %cst_10 : f32 to vector<8x32xf32>
      %33 = arith.addf %32, %31 : vector<8x32xf32>
      %34 = arith.divf %32, %33 : vector<8x32xf32>
      %35 = arith.mulf %26, %arg6 : vector<8x32xf32>
      %36 = arith.mulf %20, %28 : vector<8x32xf32>
      %37 = arith.addf %35, %36 : vector<8x32xf32>
      %38 = math.tanh %37 : vector<8x32xf32>
      %39 = arith.mulf %34, %38 : vector<8x32xf32>
      %40 = arith.truncf %arg7 : vector<8x32xf32> to vector<8x32xbf16>
      %cst_11 = arith.constant dense<0.000000e+00> : vector<8x128xf32>
      %41 = tpu.matmul %40, %1, %cst_11 {dimension_numbers = #tpu.dot_dimension_numbers<[1], [0], [0], [1], [0, 0, 1, 1], [], []>} : vector<8x32xbf16>, vector<32x128xbf16>, vector<8x128xf32> -> vector<8x128xf32>
      %42 = arith.addf %11, %41 : vector<8x128xf32>
      %43 = vector.extract_strided_slice %42 {offsets = [0, 0], sizes = [8, 32], strides = [1, 1]} : vector<8x128xf32> to vector<8x32xf32>
      %44 = arith.negf %43 : vector<8x32xf32>
      %45 = math.exp %44 : vector<8x32xf32>
      %cst_12 = arith.constant 1.000000e+00 : f32
      %46 = vector.broadcast %cst_12 : f32 to vector<8x32xf32>
      %47 = arith.addf %46, %45 : vector<8x32xf32>
      %48 = arith.divf %46, %47 : vector<8x32xf32>
      %49 = vector.extract_strided_slice %42 {offsets = [0, 32], sizes = [8, 32], strides = [1, 1]} : vector<8x128xf32> to vector<8x32xf32>
      %50 = arith.negf %49 : vector<8x32xf32>
      %51 = math.exp %50 : vector<8x32xf32>
      %cst_13 = arith.constant 1.000000e+00 : f32
      %52 = vector.broadcast %cst_13 : f32 to vector<8x32xf32>
      %53 = arith.addf %52, %51 : vector<8x32xf32>
      %54 = arith.divf %52, %53 : vector<8x32xf32>
      %55 = vector.extract_strided_slice %42 {offsets = [0, 64], sizes = [8, 32], strides = [1, 1]} : vector<8x128xf32> to vector<8x32xf32>
      %56 = math.tanh %55 : vector<8x32xf32>
      %57 = vector.extract_strided_slice %42 {offsets = [0, 96], sizes = [8, 32], strides = [1, 1]} : vector<8x128xf32> to vector<8x32xf32>
      %58 = arith.negf %57 : vector<8x32xf32>
      %59 = math.exp %58 : vector<8x32xf32>
      %cst_14 = arith.constant 1.000000e+00 : f32
      %60 = vector.broadcast %cst_14 : f32 to vector<8x32xf32>
      %61 = arith.addf %60, %59 : vector<8x32xf32>
      %62 = arith.divf %60, %61 : vector<8x32xf32>
      %63 = arith.mulf %54, %arg8 : vector<8x32xf32>
      %64 = arith.mulf %48, %56 : vector<8x32xf32>
      %65 = arith.addf %63, %64 : vector<8x32xf32>
      %66 = math.tanh %65 : vector<8x32xf32>
      %67 = arith.mulf %62, %66 : vector<8x32xf32>
      %68 = vector.shape_cast %39 : vector<8x32xf32> to vector<1x8x32xf32>
      %69 = arith.index_cast %arg4 : i32 to index
      %c0_15 = arith.constant 0 : index
      %c0_16 = arith.constant 0 : index
      %70 = vector.load %arg3[%69, %c0_15, %c0_16] : memref<8x8x64xf32, #tpu.memory_space<vmem>>, vector<1x8x32xf32>
      tpu.vector_store %arg3[%69, %c0_15, %c0_16], %68 {strides = array<i32>} : memref<8x8x64xf32, #tpu.memory_space<vmem>>, vector<1x8x32xf32>,
      %71 = vector.shape_cast %67 : vector<8x32xf32> to vector<1x8x32xf32>
      %72 = arith.index_cast %5 : i32 to index
      %c0_17 = arith.constant 0 : index
      %c32 = arith.constant 32 : index
      %73 = vector.load %arg3[%72, %c0_17, %c32] : memref<8x8x64xf32, #tpu.memory_space<vmem>>, vector<1x8x32xf32>
      tpu.vector_store %arg3[%72, %c0_17, %c32], %71 {strides = array<i32>} : memref<8x8x64xf32, #tpu.memory_space<vmem>>, vector<1x8x32xf32>,
      scf.yield %39, %37, %67, %65 : vector<8x32xf32>, vector<8x32xf32>, vector<8x32xf32>, vector<8x32xf32>
    }
    %c8_i32_3 = arith.constant 8 : i32
    return
  }
}

module attributes {stable_mosaic.version = 11 : i64} {
  func.func @gates_kernel(%arg0: i32, %arg1: memref<64x16xf32, #tpu.memory_space<vmem>>, %arg2: memref<16x256xbf16, #tpu.memory_space<vmem>>, %arg3: memref<1x256xf32, #tpu.memory_space<vmem>>, %arg4: memref<64x256xf32, #tpu.memory_space<vmem>>) attributes {dimension_semantics = [#tpu.dimension_semantics<parallel>], iteration_bounds = array<i64: 1>, scalar_prefetch = 0 : i64, scratch_operands = 0 : i64, tpu.core_type = #tpu.core_type<tc>, window_params = [{transform_indices = @transform_0, window_bounds = array<i64: 64, 16>}, {pipeline_mode = #tpu.pipeline_mode<synchronous>, transform_indices = @transform_1, window_bounds = array<i64: 16, 256>}, {pipeline_mode = #tpu.pipeline_mode<synchronous>, transform_indices = @transform_2, window_bounds = array<i64: 1, 256>}, {transform_indices = @transform_3, window_bounds = array<i64: 64, 256>}]} {
    %c0 = arith.constant 0 : index
    %c0_0 = arith.constant 0 : index
    %0 = vector.load %arg1[%c0, %c0_0] : memref<64x16xf32, #tpu.memory_space<vmem>>, vector<64x16xf32>
    %1 = arith.truncf %0 : vector<64x16xf32> to vector<64x16xbf16>
    %c0_1 = arith.constant 0 : index
    %c0_2 = arith.constant 0 : index
    %2 = vector.load %arg2[%c0_1, %c0_2] : memref<16x256xbf16, #tpu.memory_space<vmem>>, vector<16x256xbf16>
    %cst = arith.constant dense<0.000000e+00> : vector<64x256xf32>
    %3 = tpu.matmul %1, %2, %cst {dimension_numbers = #tpu.dot_dimension_numbers<[1], [0], [0], [1], [0, 0, 1, 1], [], []>} : vector<64x16xbf16>, vector<16x256xbf16>, vector<64x256xf32> -> vector<64x256xf32>
    %c0_3 = arith.constant 0 : index
    %c0_4 = arith.constant 0 : index
    %4 = vector.load %arg3[%c0_3, %c0_4] : memref<1x256xf32, #tpu.memory_space<vmem>>, vector<1x256xf32>
    %5 = vector.broadcast %4 : vector<1x256xf32> to vector<64x256xf32>
    %6 = arith.addf %3, %5 : vector<64x256xf32>
    %c0_5 = arith.constant 0 : index
    %c0_6 = arith.constant 0 : index
    %7 = vector.load %arg4[%c0_5, %c0_6] : memref<64x256xf32, #tpu.memory_space<vmem>>, vector<64x256xf32>
    tpu.vector_store %arg4[%c0_5, %c0_6], %6 {strides = array<i32>} : memref<64x256xf32, #tpu.memory_space<vmem>>, vector<64x256xf32>,
    return
  }
  func.func @transform_0(%arg0: i32) -> (i32, i32) {
    %c0_i32 = arith.constant 0 : i32
    %c0_i32_0 = arith.constant 0 : i32
    return %arg0, %c0_i32 : i32, i32
  }
  func.func @transform_1(%arg0: i32) -> (i32, i32) {
    %c0_i32 = arith.constant 0 : i32
    %c0_i32_0 = arith.constant 0 : i32
    %c0_i32_1 = arith.constant 0 : i32
    return %c0_i32, %c0_i32_0 : i32, i32
  }
  func.func @transform_2(%arg0: i32) -> (i32, i32) {
    %c0_i32 = arith.constant 0 : i32
    %c0_i32_0 = arith.constant 0 : i32
    %c0_i32_1 = arith.constant 0 : i32
    return %c0_i32, %c0_i32_0 : i32, i32
  }
  func.func @transform_3(%arg0: i32) -> (i32, i32) {
    %c0_i32 = arith.constant 0 : i32
    %c0_i32_0 = arith.constant 0 : i32
    return %arg0, %c0_i32 : i32, i32
  }
}

module attributes {stable_mosaic.version = 11 : i64} {
  func.func @gates_kernel(%arg0: i32, %arg1: memref<64x64xf32, #tpu.memory_space<vmem>>, %arg2: memref<64x256xbf16, #tpu.memory_space<vmem>>, %arg3: memref<1x256xf32, #tpu.memory_space<vmem>>, %arg4: memref<64x256xf32, #tpu.memory_space<vmem>>) attributes {dimension_semantics = [#tpu.dimension_semantics<parallel>], iteration_bounds = array<i64: 1>, scalar_prefetch = 0 : i64, scratch_operands = 0 : i64, tpu.core_type = #tpu.core_type<tc>, window_params = [{transform_indices = @transform_0, window_bounds = array<i64: 64, 64>}, {pipeline_mode = #tpu.pipeline_mode<synchronous>, transform_indices = @transform_1, window_bounds = array<i64: 64, 256>}, {pipeline_mode = #tpu.pipeline_mode<synchronous>, transform_indices = @transform_2, window_bounds = array<i64: 1, 256>}, {transform_indices = @transform_3, window_bounds = array<i64: 64, 256>}]} {
    %c0 = arith.constant 0 : index
    %c0_0 = arith.constant 0 : index
    %0 = vector.load %arg1[%c0, %c0_0] : memref<64x64xf32, #tpu.memory_space<vmem>>, vector<64x64xf32>
    %1 = arith.truncf %0 : vector<64x64xf32> to vector<64x64xbf16>
    %c0_1 = arith.constant 0 : index
    %c0_2 = arith.constant 0 : index
    %2 = vector.load %arg2[%c0_1, %c0_2] : memref<64x256xbf16, #tpu.memory_space<vmem>>, vector<64x256xbf16>
    %cst = arith.constant dense<0.000000e+00> : vector<64x256xf32>
    %3 = tpu.matmul %1, %2, %cst {dimension_numbers = #tpu.dot_dimension_numbers<[1], [0], [0], [1], [0, 0, 1, 1], [], []>} : vector<64x64xbf16>, vector<64x256xbf16>, vector<64x256xf32> -> vector<64x256xf32>
    %c0_3 = arith.constant 0 : index
    %c0_4 = arith.constant 0 : index
    %4 = vector.load %arg3[%c0_3, %c0_4] : memref<1x256xf32, #tpu.memory_space<vmem>>, vector<1x256xf32>
    %5 = vector.broadcast %4 : vector<1x256xf32> to vector<64x256xf32>
    %6 = arith.addf %3, %5 : vector<64x256xf32>
    %c0_5 = arith.constant 0 : index
    %c0_6 = arith.constant 0 : index
    %7 = vector.load %arg4[%c0_5, %c0_6] : memref<64x256xf32, #tpu.memory_space<vmem>>, vector<64x256xf32>
    tpu.vector_store %arg4[%c0_5, %c0_6], %6 {strides = array<i32>} : memref<64x256xf32, #tpu.memory_space<vmem>>, vector<64x256xf32>,
    return
  }
  func.func @transform_0(%arg0: i32) -> (i32, i32) {
    %c0_i32 = arith.constant 0 : i32
    %c0_i32_0 = arith.constant 0 : i32
    return %arg0, %c0_i32 : i32, i32
  }
  func.func @transform_1(%arg0: i32) -> (i32, i32) {
    %c0_i32 = arith.constant 0 : i32
    %c0_i32_0 = arith.constant 0 : i32
    %c0_i32_1 = arith.constant 0 : i32
    return %c0_i32, %c0_i32_0 : i32, i32
  }
  func.func @transform_2(%arg0: i32) -> (i32, i32) {
    %c0_i32 = arith.constant 0 : i32
    %c0_i32_0 = arith.constant 0 : i32
    %c0_i32_1 = arith.constant 0 : i32
    return %c0_i32, %c0_i32_0 : i32, i32
  }
  func.func @transform_3(%arg0: i32) -> (i32, i32) {
    %c0_i32 = arith.constant 0 : i32
    %c0_i32_0 = arith.constant 0 : i32
    return %arg0, %c0_i32 : i32, i32
  }
}

module attributes {stable_mosaic.version = 11 : i64} {
  func.func @emission_kernel(%arg0: i32, %arg1: memref<64x64xf32, #tpu.memory_space<vmem>>, %arg2: memref<64x2xbf16, #tpu.memory_space<vmem>>, %arg3: memref<1x2xf32, #tpu.memory_space<vmem>>, %arg4: memref<64x2xf32, #tpu.memory_space<vmem>>) attributes {dimension_semantics = [#tpu.dimension_semantics<parallel>], iteration_bounds = array<i64: 1>, scalar_prefetch = 0 : i64, scratch_operands = 0 : i64, tpu.core_type = #tpu.core_type<tc>, window_params = [{transform_indices = @transform_0, window_bounds = array<i64: 64, 64>}, {pipeline_mode = #tpu.pipeline_mode<synchronous>, transform_indices = @transform_1, window_bounds = array<i64: 64, 2>}, {pipeline_mode = #tpu.pipeline_mode<synchronous>, transform_indices = @transform_2, window_bounds = array<i64: 1, 2>}, {transform_indices = @transform_3, window_bounds = array<i64: 64, 2>}]} {
    %c0 = arith.constant 0 : index
    %c0_0 = arith.constant 0 : index
    %0 = vector.load %arg1[%c0, %c0_0] : memref<64x64xf32, #tpu.memory_space<vmem>>, vector<64x64xf32>
    %1 = arith.truncf %0 : vector<64x64xf32> to vector<64x64xbf16>
    %c0_1 = arith.constant 0 : index
    %c0_2 = arith.constant 0 : index
    %2 = vector.load %arg2[%c0_1, %c0_2] : memref<64x2xbf16, #tpu.memory_space<vmem>>, vector<64x2xbf16>
    %cst = arith.constant dense<0.000000e+00> : vector<64x2xf32>
    %3 = tpu.matmul %1, %2, %cst {dimension_numbers = #tpu.dot_dimension_numbers<[1], [0], [0], [1], [0, 0, 1, 1], [], []>} : vector<64x64xbf16>, vector<64x2xbf16>, vector<64x2xf32> -> vector<64x2xf32>
    %c0_3 = arith.constant 0 : index
    %c0_4 = arith.constant 0 : index
    %4 = vector.load %arg3[%c0_3, %c0_4] : memref<1x2xf32, #tpu.memory_space<vmem>>, vector<1x2xf32>
    %5 = vector.broadcast %4 : vector<1x2xf32> to vector<64x2xf32>
    %6 = arith.addf %3, %5 : vector<64x2xf32>
    %7 = vector.extract_strided_slice %6 {offsets = [0, 1], sizes = [64, 1], strides = [1, 1]} : vector<64x2xf32> to vector<64x1xf32>
    %8 = vector.extract_strided_slice %6 {offsets = [0, 0], sizes = [64, 1], strides = [1, 1]} : vector<64x2xf32> to vector<64x1xf32>
    %9 = arith.subf %7, %8 : vector<64x1xf32>
    %10 = arith.negf %9 : vector<64x1xf32>
    %11 = math.exp %10 : vector<64x1xf32>
    %cst_5 = arith.constant 1.000000e+00 : f32
    %12 = vector.broadcast %cst_5 : f32 to vector<64x1xf32>
    %13 = arith.addf %12, %11 : vector<64x1xf32>
    %14 = arith.divf %12, %13 : vector<64x1xf32>
    %cst_6 = arith.constant 1.000000e+00 : f32
    %15 = vector.broadcast %cst_6 : f32 to vector<64x1xf32>
    %16 = arith.subf %15, %14 : vector<64x1xf32>
    %17 = tpu.concatenate %16, %14 in 1 : vector<64x1xf32>, vector<64x1xf32> -> vector<64x2xf32>
    %c0_7 = arith.constant 0 : index
    %c0_8 = arith.constant 0 : index
    %18 = vector.load %arg4[%c0_7, %c0_8] : memref<64x2xf32, #tpu.memory_space<vmem>>, vector<64x2xf32>
    tpu.vector_store %arg4[%c0_7, %c0_8], %17 {strides = array<i32>} : memref<64x2xf32, #tpu.memory_space<vmem>>, vector<64x2xf32>,
    return
  }
  func.func @transform_0(%arg0: i32) -> (i32, i32) {
    %c0_i32 = arith.constant 0 : i32
    %c0_i32_0 = arith.constant 0 : i32
    return %arg0, %c0_i32 : i32, i32
  }
  func.func @transform_1(%arg0: i32) -> (i32, i32) {
    %c0_i32 = arith.constant 0 : i32
    %c0_i32_0 = arith.constant 0 : i32
    %c0_i32_1 = arith.constant 0 : i32
    return %c0_i32, %c0_i32_0 : i32, i32
  }
  func.func @transform_2(%arg0: i32) -> (i32, i32) {
    %c0_i32 = arith.constant 0 : i32
    %c0_i32_0 = arith.constant 0 : i32
    %c0_i32_1 = arith.constant 0 : i32
    return %c0_i32, %c0_i32_0 : i32, i32
  }
  func.func @transform_3(%arg0: i32) -> (i32, i32) {
    %c0_i32 = arith.constant 0 : i32
    %c0_i32_0 = arith.constant 0 : i32
    return %arg0, %c0_i32 : i32, i32
  }
}

</mosaic_0001>

<llo_original>
// kernel: lstm_crf_forward.5
$region0: #{lstm_crf_forward.5}
  #allocation0 [shape = 'u32[]', space=smem, size = 0x4, offset = 0x4, fixed_abs, tag = 'smem constant byte address 0x4 - core index']
  #allocation1 [shape = 'u32[144,128]{1,0:T(1,128)}', space=vmem, size = 0x12000, scoped, tag = 'internal scratch']
  %s0 = inlined_call_operand.vmem [shape: f32[64,16], index: 0, kind: input, shape index: {}]
  %s1 = inlined_call_operand.vmem [shape: bf16[16,256], index: 1, kind: input, shape index: {}]
  %s2 = inlined_call_operand.vmem [shape: f32[1,256], index: 2, kind: input, shape index: {}]
  %s3 = inlined_call_operand.vmem [shape: f32[64,256], index: 3, kind: output, shape index: {}]
  %s4 = sld [smem:[#allocation0]]
  $region22: #{lstm_crf_forward.5} parent=0
    _
  %s6 = ssub.s32 1, %s4
  %s7 = scalar_select 0, %s6, %s4
  // Predicated region
  $region2: #{lstm_crf_forward.5} parent=0 // pred_check
    _
  $region3: #{lstm_crf_forward.5} parent=0 // pred_check_branch
    %9 = sbr.rel (0) target = $region5
  $region4: #{lstm_crf_forward.5} parent=0 // pred_region
    _
  $region5: #{lstm_crf_forward.5} parent=0 // pred_fallthru
    _
  // Predicated region
  $region6: #{lstm_crf_forward.5} parent=0 // pred_check
    _
  $region7: #{lstm_crf_forward.5} parent=0 // pred_check_branch
    %11 = sbr.rel (0) target = $region9
  $region8: #{lstm_crf_forward.5} parent=0 // pred_region
    _
  $region9: #{lstm_crf_forward.5} parent=0 // pred_fallthru
    _
  // Predicated region
  $region10: #{lstm_crf_forward.5} parent=0 // pred_check
    _
  $region11: #{lstm_crf_forward.5} parent=0 // pred_check_branch
    %13 = sbr.rel (0) target = $region13
  $region12: #{lstm_crf_forward.5} parent=0 // pred_region
    _
  $region13: #{lstm_crf_forward.5} parent=0 // pred_fallthru
    _
  %v15 = vld [vmem:[%s0] sm:$0xff]
  %v16 = vld [vmem:[%s0 + $0x8] sm:$0xff]
  %v17 = vld [vmem:[%s0 + $0x10] sm:$0xff]
  %v18 = vld [vmem:[%s0 + $0x18] sm:$0xff]
  %v19 = vld [vmem:[%s0 + $0x20] sm:$0xff]
  %v20 = vld [vmem:[%s0 + $0x28] sm:$0xff]
  %v21 = vld [vmem:[%s0 + $0x30] sm:$0xff]
  %v22 = vld [vmem:[%s0 + $0x38] sm:$0xff]
  %v23 = vpack.c.bf16 %v16, %v15
  %v24 = vpack.c.bf16 %v18, %v17
  %v25 = vpack.c.bf16 %v20, %v19
  %v26 = vpack.c.bf16 %v22, %v21
  %v27 = vld [vmem:[%s1] sm:$0xff]
  %v28 = vld [vmem:[%s1 + $0x8] sm:$0xff]
  %v29 = vld [vmem:[%s2] sm:$0x3]
  %v31 = vlaneseq
  %v32 = vshrl.u32 %v31, 7
  %v33 = vsub.s32 0, %v32
  %v34 = vrot.slane %v29, %v33
  %v35 = vlaneseq
  %v36 = vshrl.u32 %v35, 7
  %v37 = vsub.s32 1, %v36
  %v38 = vrot.slane %v29, %v37
  %v43 = vunpack.c.l.b16 %v27
  %v44 = vunpack.c.h.b16 %v27
  %v45 = vunpack.c.l.b16 %v28
  %v46 = vunpack.c.h.b16 %v28
  %v47 = vpack.c.b16 %v45, %v43
  %v48 = vpack.c.b16 %v46, %v44
  %vm51 = vcmask 130048
  %v53 = vsel %vm51, %v23, 0
  %v56 = vsel %vm51, %v24, 0
  %v59 = vsel %vm51, %v25, 0
  %v62 = vsel %vm51, %v26, 0
  %64 = vmatprep.subr.bf16.mxu0 %v48
  %65 = vmatpush1.bf16.msra.mxu0 %v47
  %66 = vmatprep.subr.bf16.mxu0 0
  %67 = vmatpush1.bf16.msra.mxu0 0
  %68 = vmatprep.subr.bf16.mxu0 0
  %69 = vmatpush1.bf16.msra.mxu0 0
  %70 = vmatprep.subr.bf16.mxu0 0
  %71 = vmatpush1.bf16.msra.mxu0 0
  %72 = vmatprep.subr.bf16.mxu0 0
  %73 = vmatpush1.bf16.msra.mxu0 0
  %74 = vmatprep.subr.bf16.mxu0 0
  %75 = vmatpush1.bf16.msra.mxu0 0
  %76 = vmatprep.subr.bf16.mxu0 0
  %77 = vmatpush1.bf16.msra.mxu0 0
  %78 = vmatprep.subr.bf16.mxu0 0
  %79 = vmatpush1.bf16.msra.mxu0 0
  %80 = vmatprep.subr.bf16.mxu0 0
  %81 = vmatpush1.bf16.msra.mxu0 0
  %82 = vmatprep.subr.bf16.mxu0 0
  %83 = vmatpush1.bf16.msra.mxu0 0
  %84 = vmatprep.subr.bf16.mxu0 0
  %85 = vmatpush1.bf16.msra.mxu0 0
  %86 = vmatprep.subr.bf16.mxu0 0
  %87 = vmatpush1.bf16.msra.mxu0 0
  %88 = vmatprep.subr.bf16.mxu0 0
  %89 = vmatpush1.bf16.msra.mxu0 0
  %90 = vmatprep.subr.bf16.mxu0 0
  %91 = vmatpush1.bf16.msra.mxu0 0
  %92 = vmatprep.subr.bf16.mxu0 0
  %93 = vmatpush1.bf16.msra.mxu0 0
  %94 = vmatprep.subr.bf16.mxu0 0
  %95 = vmatpush1.bf16.msra.mxu0 0
  %96 = vmatprep.mubr.bf16.mxu0 0
  %97 = vmatmul.mubr.bf16.gmra.mrb[0].mxu0 %v53
  %v98 = vpop.f32.mrb[0].mxu0
  %v99 = vadd.f32 %v34, %v98
  %v100 = vpop.f32.mrb[0].mxu0
  %v101 = vadd.f32 %v38, %v100
  %v102 = vpop.f32.mrb[0].mxu0
  %v103 = vadd.f32 %v34, %v102
  %v104 = vpop.f32.mrb[0].mxu0
  %v105 = vadd.f32 %v38, %v104
  %106 = vmatprep.mubr.bf16.mxu0 0
  %107 = vmatmul.mubr.bf16.gmra.mrb[0].mxu0 %v56
  %v108 = vpop.f32.mrb[0].mxu0
  %v109 = vadd.f32 %v34, %v108
  %v110 = vpop.f32.mrb[0].mxu0
  %v111 = vadd.f32 %v38, %v110
  %v112 = vpop.f32.mrb[0].mxu0
  %v113 = vadd.f32 %v34, %v112
  %v114 = vpop.f32.mrb[0].mxu0
  %v115 = vadd.f32 %v38, %v114
  %116 = vmatprep.mubr.bf16.mxu0 0
  %117 = vmatmul.mubr.bf16.gmra.mrb[0].mxu0 %v59
  %v118 = vpop.f32.mrb[0].mxu0
  %v119 = vadd.f32 %v34, %v118
  %v120 = vpop.f32.mrb[0].mxu0
  %v121 = vadd.f32 %v38, %v120
  %v122 = vpop.f32.mrb[0].mxu0
  %v123 = vadd.f32 %v34, %v122
  %v124 = vpop.f32.mrb[0].mxu0
  %v125 = vadd.f32 %v38, %v124
  %126 = vmatprep.mubr.bf16.mxu0 0
  %127 = vmatmul.mubr.bf16.gmra.mrb[0].mxu0 %v62
  %v128 = vpop.f32.mrb[0].mxu0
  %v129 = vadd.f32 %v34, %v128
  %v130 = vpop.f32.mrb[0].mxu0
  %v131 = vadd.f32 %v38, %v130
  %v132 = vpop.f32.mrb[0].mxu0
  %v133 = vadd.f32 %v34, %v132
  %v134 = vpop.f32.mrb[0].mxu0
  %v135 = vadd.f32 %v38, %v134
  %136 = vdwg.mxu0
  %137 = vst [vmem:[%s3] sm:$0xff] %v99
  %138 = vst [vmem:[%s3 + $0x8] sm:$0xff] %v101
  %139 = vst [vmem:[%s3 + $0x10] sm:$0xff] %v103
  %140 = vst [vmem:[%s3 + $0x18] sm:$0xff] %v105
  %141 = vst [vmem:[%s3 + $0x20] sm:$0xff] %v109
  %142 = vst [vmem:[%s3 + $0x28] sm:$0xff] %v111
  %143 = vst [vmem:[%s3 + $0x30] sm:$0xff] %v113
  %144 = vst [vmem:[%s3 + $0x38] sm:$0xff] %v115
  %145 = vst [vmem:[%s3 + $0x40] sm:$0xff] %v119
  %146 = vst [vmem:[%s3 + $0x48] sm:$0xff] %v121
  %147 = vst [vmem:[%s3 + $0x50] sm:$0xff] %v123
  %148 = vst [vmem:[%s3 + $0x58] sm:$0xff] %v125
  %149 = vst [vmem:[%s3 + $0x60] sm:$0xff] %v129
  %150 = vst [vmem:[%s3 + $0x68] sm:$0xff] %v131
  %151 = vst [vmem:[%s3 + $0x70] sm:$0xff] %v133
  %152 = vst [vmem:[%s3 + $0x78] sm:$0xff] %v135
  // Predicated region
  $region14: #{lstm_crf_forward.5} parent=0 // pred_check
    _
  $region15: #{lstm_crf_forward.5} parent=0 // pred_check_branch
    %154 = sbr.rel (0) target = $region17
  $region16: #{lstm_crf_forward.5} parent=0 // pred_region
    _
  $region17: #{lstm_crf_forward.5} parent=0 // pred_fallthru
    _
  // Predicated region
  $region18: #{lstm_crf_forward.5} parent=0 // pred_check
    _
  $region19: #{lstm_crf_forward.5} parent=0 // pred_check_branch
    %156 = sbr.rel (0) target = $region21
  $region20: #{lstm_crf_forward.5} parent=0 // pred_region
    _
  $region21: #{lstm_crf_forward.5} parent=0 // pred_fallthru
    _

// kernel: lstm_crf_forward.6
$region0: #{lstm_crf_forward.6}
  #allocation0 [shape = 'u32[]', space=smem, size = 0x4, offset = 0x4, fixed_abs, tag = 'smem constant byte address 0x4 - core index']
  #allocation1 [shape = 'u32[144,128]{1,0:T(1,128)}', space=vmem, size = 0x12000, scoped, tag = 'internal scratch']
  %s0 = inlined_call_operand.vmem [shape: f32[8,8,256], index: 0, kind: input, shape index: {}]
  %s1 = inlined_call_operand.vmem [shape: bf16[32,128], index: 1, kind: input, shape index: {}]
  %s2 = inlined_call_operand.vmem [shape: bf16[32,128], index: 2, kind: input, shape index: {}]
  %s3 = inlined_call_operand.vmem [shape: f32[8,8,64], index: 3, kind: output, shape index: {}]
  %s4 = sld [smem:[#allocation0]]
  $region29: #{lstm_crf_forward.6} parent=0
    _
  %s6 = ssub.s32 1, %s4
  %s7 = scalar_select 0, %s6, %s4
  // Predicated region
  $region2: #{lstm_crf_forward.6} parent=0 // pred_check
    _
  $region3: #{lstm_crf_forward.6} parent=0 // pred_check_branch
    %9 = sbr.rel (0) target = $region5
  $region4: #{lstm_crf_forward.6} parent=0 // pred_region
    _
  $region5: #{lstm_crf_forward.6} parent=0 // pred_fallthru
    _
  // Predicated region
  $region6: #{lstm_crf_forward.6} parent=0 // pred_check
    _
  $region7: #{lstm_crf_forward.6} parent=0 // pred_check_branch
    %11 = sbr.rel (0) target = $region9
  $region8: #{lstm_crf_forward.6} parent=0 // pred_region
    _
  $region9: #{lstm_crf_forward.6} parent=0 // pred_fallthru
    _
  // Predicated region
  $region10: #{lstm_crf_forward.6} parent=0 // pred_check
    _
  $region11: #{lstm_crf_forward.6} parent=0 // pred_check_branch
    %13 = sbr.rel (0) target = $region13
  $region12: #{lstm_crf_forward.6} parent=0 // pred_region
    _
  $region13: #{lstm_crf_forward.6} parent=0 // pred_fallthru
    _
  %v15 = vld [vmem:[%s1] sm:$0xf]
  %v16 = vld [vmem:[%s1 + $0x4] sm:$0xf]
  %v17 = vld [vmem:[%s1 + $0x8] sm:$0xf]
  %v18 = vld [vmem:[%s1 + $0xc] sm:$0xf]
  %v19 = vld [vmem:[%s2] sm:$0xf]
  %v20 = vld [vmem:[%s2 + $0x4] sm:$0xf]
  %v21 = vld [vmem:[%s2 + $0x8] sm:$0xf]
  %v22 = vld [vmem:[%s2 + $0xc] sm:$0xf]
  loop: start=0, step=1, limit=8
  $region14: #{lstm_crf_forward.6} parent=0 // loop_pre_header
    _
  $region15: #{lstm_crf_forward.6} parent=0 // loop_header
    %s24 = sphi 0, %s28
    %p25 = scmp.ge.s32.totalorder %s24, 8
    %v29 = vphi 0.0, %v126
    %v30 = vphi 0.0, %v120
    %v31 = vphi 0.0, %v210
    %v32 = vphi 0.0, %v204
  $region16: #{lstm_crf_forward.6} parent=0 // loop_header_branch
    %27 = sbr.rel (%p25) target = $region20
  $region17: #{lstm_crf_forward.6} parent=0 // loop_body
    %s33 = ssub.s32 7, %s24
    %s34 = smul.u32 %s24, 2
    %s35 = smul.addr %s34, 8
    %s36 = scalar_lea.vmem %s0, %s35
    %v37 = vld [vmem:[%s36] sm:$0xff]
    %s38 = smul.u32 %s33, 2
    %s39 = smul.addr %s38, 8
    %s40 = scalar_lea.vmem %s0, %s39
    %v41 = vld [vmem:[%s40 + $0x8] sm:$0xff]
    %v42 = vpack.c.bf16 %v29, %v29
    %44 = vrot.lane.b32.xlu0 %v42, 32
    %v45 = vpop.permute.xlu0 %44
    %v50 = vunpack.c.l.b16 %v15
    %v51 = vunpack.c.l.b16 %v16
    %v52 = vunpack.c.l.b16 %v17
    %v53 = vunpack.c.l.b16 %v18
    %v54 = vpack.c.b16 %v51, %v50
    %v55 = vpack.c.b16 %v53, %v52
    %vm58 = vcmask 261120
    %v60 = vsel %vm58, %v45, 0
    %62 = vmatprep.subr.bf16.mxu0 0
    %63 = vmatpush1.bf16.msra.mxu0 %v54
    %64 = vmatprep.subr.bf16.mxu0 0
    %65 = vmatpush1.bf16.msra.mxu0 %v55
    %66 = vmatprep.subr.bf16.mxu0 0
    %67 = vmatpush1.bf16.msra.mxu0 0
    %68 = vmatprep.subr.bf16.mxu0 0
    %69 = vmatpush1.bf16.msra.mxu0 0
    %70 = vmatprep.subr.bf16.mxu0 0
    %71 = vmatpush1.bf16.msra.mxu0 0
    %72 = vmatprep.subr.bf16.mxu0 0
    %73 = vmatpush1.bf16.msra.mxu0 0
    %74 = vmatprep.subr.bf16.mxu0 0
    %75 = vmatpush1.bf16.msra.mxu0 0
    %76 = vmatprep.subr.bf16.mxu0 0
    %77 = vmatpush1.bf16.msra.mxu0 0
    %78 = vmatprep.subr.bf16.mxu0 0
    %79 = vmatpush1.bf16.msra.mxu0 0
    %80 = vmatprep.subr.bf16.mxu0 0
    %81 = vmatpush1.bf16.msra.mxu0 0
    %82 = vmatprep.subr.bf16.mxu0 0
    %83 = vmatpush1.bf16.msra.mxu0 0
    %84 = vmatprep.subr.bf16.mxu0 0
    %85 = vmatpush1.bf16.msra.mxu0 0
    %86 = vmatprep.subr.bf16.mxu0 0
    %87 = vmatpush1.bf16.msra.mxu0 0
    %88 = vmatprep.subr.bf16.mxu0 0
    %89 = vmatpush1.bf16.msra.mxu0 0
    %90 = vmatprep.subr.bf16.mxu0 0
    %91 = vmatpush1.bf16.msra.mxu0 0
    %92 = vmatprep.subr.bf16.mxu0 0
    %93 = vmatpush1.bf16.msra.mxu0 0
    %94 = vmatprep.mubr.bf16.mxu0 0
    %95 = vmatmul.mubr.bf16.gmra.mrb[0].mxu0 %v60
    %v96 = vpop.f32.mrb[0].mxu0
    %v97 = vadd.f32 0.0, %v96
    %v98 = vpop.f32.mrb[0].mxu0
    %v99 = vpop.f32.mrb[0].mxu0
    %v100 = vpop.f32.mrb[0].mxu0
    %101 = vdwg.mxu0
    %v102 = vadd.f32 %v37, %v97
    %v103 = vxor.u32 %v102, 2147483648
    %v104 = vmul.f32 %v103, 1.442695
    %v105 = vpow.pop %v104
    %v106 = vadd.f32 %v105, 1.0
    %v107 = vrcp.pop %v106
    %v108 = vmul.f32 1.0, %v107
    %v109 = vtanh.pop %v102
    %v110 = vmul.f32 %v108, %v30
    %112 = vrot.lane.b32.xlu0 %v109, 64
    %v113 = vpop.permute.xlu0 %112
    %v115 = vmul.f32 %v108, %v113
    %117 = vrot.lane.b32.xlu0 %v115, 32
    %v118 = vpop.permute.xlu0 %117
    %v120 = vadd.f32 %v110, %v118
    %v121 = vtanh.pop %v120
    %123 = vrot.lane.b32.xlu0 %v121, 64
    %v124 = vpop.permute.xlu0 %123
    %v126 = vmul.f32 %v108, %v124
    %v127 = vpack.c.bf16 %v31, %v31
    %129 = vrot.lane.b32.xlu0 %v127, 32
    %v130 = vpop.permute.xlu0 %129
    %v135 = vunpack.c.l.b16 %v19
    %v136 = vunpack.c.l.b16 %v20
    %v137 = vunpack.c.l.b16 %v21
    %v138 = vunpack.c.l.b16 %v22
    %v139 = vpack.c.b16 %v136, %v135
    %v140 = vpack.c.b16 %v138, %v137
    %v144 = vsel %vm58, %v130, 0
    %146 = vmatprep.subr.bf16.mxu0 0
    %147 = vmatpush1.bf16.msra.mxu0 %v139
    %148 = vmatprep.subr.bf16.mxu0 0
    %149 = vmatpush1.bf16.msra.mxu0 %v140
    %150 = vmatprep.subr.bf16.mxu0 0
    %151 = vmatpush1.bf16.msra.mxu0 0
    %152 = vmatprep.subr.bf16.mxu0 0
    %153 = vmatpush1.bf16.msra.mxu0 0
    %154 = vmatprep.subr.bf16.mxu0 0
    %155 = vmatpush1.bf16.msra.mxu0 0
    %156 = vmatprep.subr.bf16.mxu0 0
    %157 = vmatpush1.bf16.msra.mxu0 0
    %158 = vmatprep.subr.bf16.mxu0 0
    %159 = vmatpush1.bf16.msra.mxu0 0
    %160 = vmatprep.subr.bf16.mxu0 0
    %161 = vmatpush1.bf16.msra.mxu0 0
    %162 = vmatprep.subr.bf16.mxu0 0
    %163 = vmatpush1.bf16.msra.mxu0 0
    %164 = vmatprep.subr.bf16.mxu0 0
    %165 = vmatpush1.bf16.msra.mxu0 0
    %166 = vmatprep.subr.bf16.mxu0 0
    %167 = vmatpush1.bf16.msra.mxu0 0
    %168 = vmatprep.subr.bf16.mxu0 0
    %169 = vmatpush1.bf16.msra.mxu0 0
    %170 = vmatprep.subr.bf16.mxu0 0
    %171 = vmatpush1.bf16.msra.mxu0 0
    %172 = vmatprep.subr.bf16.mxu0 0
    %173 = vmatpush1.bf16.msra.mxu0 0
    %174 = vmatprep.subr.bf16.mxu0 0
    %175 = vmatpush1.bf16.msra.mxu0 0
    %176 = vmatprep.subr.bf16.mxu0 0
    %177 = vmatpush1.bf16.msra.mxu0 0
    %178 = vmatprep.mubr.bf16.mxu0 0
    %179 = vmatmul.mubr.bf16.gmra.mrb[0].mxu0 %v144
    %v180 = vpop.f32.mrb[0].mxu0
    %v181 = vadd.f32 0.0, %v180
    %v182 = vpop.f32.mrb[0].mxu0
    %v183 = vpop.f32.mrb[0].mxu0
    %v184 = vpop.f32.mrb[0].mxu0
    %185 = vdwg.mxu0
    %v186 = vadd.f32 %v41, %v181
    %v187 = vxor.u32 %v186, 2147483648
    %v188 = vmul.f32 %v187, 1.442695
    %v189 = vpow.pop %v188
    %v190 = vadd.f32 %v189, 1.0
    %v191 = vrcp.pop %v190
    %v192 = vmul.f32 1.0, %v191
    %v193 = vtanh.pop %v186
    %v194 = vmul.f32 %v192, %v32
    %196 = vrot.lane.b32.xlu0 %v193, 64
    %v197 = vpop.permute.xlu0 %196
    %v199 = vmul.f32 %v192, %v197
    %201 = vrot.lane.b32.xlu0 %v199, 32
    %v202 = vpop.permute.xlu0 %201
    %v204 = vadd.f32 %v194, %v202
    %v205 = vtanh.pop %v204
    %207 = vrot.lane.b32.xlu0 %v205, 64
    %v208 = vpop.permute.xlu0 %207
    %v210 = vmul.f32 %v192, %v208
    %212 = vrot.lane.b32.xlu0 %v126, 32
    %v213 = vpop.permute.xlu0 %212
    %s215 = smul.u32 %s24, 8
    %s216 = scalar_lea.vmem %s3, %s215
    %217 = vst.msk [vmem:[%s216] sm:$0xff] %vm58, %v213
    %219 = vrot.lane.b32.xlu0 %v210, 64
    %v220 = vpop.permute.xlu0 %219
    %s222 = smul.u32 %s33, 8
    %s223 = scalar_lea.vmem %s3, %s222
    %vm224 = vcmask 523520
    %225 = vst.msk [vmem:[%s223] sm:$0xff] %vm224, %v220
  $region18: #{lstm_crf_forward.6} parent=0 // loop_footer
    %s28 = sadd.s32 1, %s24
  $region19: #{lstm_crf_forward.6} parent=0 // loop_footer_branch
    %23 = sbr.rel target = $region15
  $region20: #{lstm_crf_forward.6} parent=0 // loop_exit
    _
  // Predicated region
  $region21: #{lstm_crf_forward.6} parent=0 // pred_check
    _
  $region22: #{lstm_crf_forward.6} parent=0 // pred_check_branch
    %227 = sbr.rel (0) target = $region24
  $region23: #{lstm_crf_forward.6} parent=0 // pred_region
    _
  $region24: #{lstm_crf_forward.6} parent=0 // pred_fallthru
    _
  // Predicated region
  $region25: #{lstm_crf_forward.6} parent=0 // pred_check
    _
  $region26: #{lstm_crf_forward.6} parent=0 // pred_check_branch
    %229 = sbr.rel (0) target = $region28
  $region27: #{lstm_crf_forward.6} parent=0 // pred_region
    _
  $region28: #{lstm_crf_forward.6} parent=0 // pred_fallthru
    _

// kernel: lstm_crf_forward.7
$region0: #{lstm_crf_forward.7}
  #allocation0 [shape = 'u32[]', space=smem, size = 0x4, offset = 0x4, fixed_abs, tag = 'smem constant byte address 0x4 - core index']
  #allocation1 [shape = 'u32[144,128]{1,0:T(1,128)}', space=vmem, size = 0x12000, scoped, tag = 'internal scratch']
  %s0 = inlined_call_operand.vmem [shape: f32[64,64], index: 0, kind: input, shape index: {}]
  %s1 = inlined_call_operand.vmem [shape: bf16[64,256], index: 1, kind: input, shape index: {}]
  %s2 = inlined_call_operand.vmem [shape: f32[1,256], index: 2, kind: input, shape index: {}]
  %s3 = inlined_call_operand.vmem [shape: f32[64,256], index: 3, kind: output, shape index: {}]
  %s4 = sld [smem:[#allocation0]]
  $region22: #{lstm_crf_forward.7} parent=0
    _
  %s6 = ssub.s32 1, %s4
  %s7 = scalar_select 0, %s6, %s4
  // Predicated region
  $region2: #{lstm_crf_forward.7} parent=0 // pred_check
    _
  $region3: #{lstm_crf_forward.7} parent=0 // pred_check_branch
    %9 = sbr.rel (0) target = $region5
  $region4: #{lstm_crf_forward.7} parent=0 // pred_region
    _
  $region5: #{lstm_crf_forward.7} parent=0 // pred_fallthru
    _
  // Predicated region
  $region6: #{lstm_crf_forward.7} parent=0 // pred_check
    _
  $region7: #{lstm_crf_forward.7} parent=0 // pred_check_branch
    %11 = sbr.rel (0) target = $region9
  $region8: #{lstm_crf_forward.7} parent=0 // pred_region
    _
  $region9: #{lstm_crf_forward.7} parent=0 // pred_fallthru
    _
  // Predicated region
  $region10: #{lstm_crf_forward.7} parent=0 // pred_check
    _
  $region11: #{lstm_crf_forward.7} parent=0 // pred_check_branch
    %13 = sbr.rel (0) target = $region13
  $region12: #{lstm_crf_forward.7} parent=0 // pred_region
    _
  $region13: #{lstm_crf_forward.7} parent=0 // pred_fallthru
    _
  %v15 = vld [vmem:[%s0] sm:$0xff]
  %v16 = vld [vmem:[%s0 + $0x8] sm:$0xff]
  %v17 = vld [vmem:[%s0 + $0x10] sm:$0xff]
  %v18 = vld [vmem:[%s0 + $0x18] sm:$0xff]
  %v19 = vld [vmem:[%s0 + $0x20] sm:$0xff]
  %v20 = vld [vmem:[%s0 + $0x28] sm:$0xff]
  %v21 = vld [vmem:[%s0 + $0x30] sm:$0xff]
  %v22 = vld [vmem:[%s0 + $0x38] sm:$0xff]
  %v23 = vpack.c.bf16 %v16, %v15
  %v24 = vpack.c.bf16 %v18, %v17
  %v25 = vpack.c.bf16 %v20, %v19
  %v26 = vpack.c.bf16 %v22, %v21
  %v27 = vld [vmem:[%s1] sm:$0xff]
  %v28 = vld [vmem:[%s1 + $0x8] sm:$0xff]
  %v29 = vld [vmem:[%s1 + $0x10] sm:$0xff]
  %v30 = vld [vmem:[%s1 + $0x18] sm:$0xff]
  %v31 = vld [vmem:[%s1 + $0x20] sm:$0xff]
  %v32 = vld [vmem:[%s1 + $0x28] sm:$0xff]
  %v33 = vld [vmem:[%s1 + $0x30] sm:$0xff]
  %v34 = vld [vmem:[%s1 + $0x38] sm:$0xff]
  %v35 = vld [vmem:[%s2] sm:$0x3]
  %v37 = vlaneseq
  %v38 = vshrl.u32 %v37, 7
  %v39 = vsub.s32 0, %v38
  %v40 = vrot.slane %v35, %v39
  %v41 = vlaneseq
  %v42 = vshrl.u32 %v41, 7
  %v43 = vsub.s32 1, %v42
  %v44 = vrot.slane %v35, %v43
  %v55 = vunpack.c.l.b16 %v27
  %v56 = vunpack.c.h.b16 %v27
  %v57 = vunpack.c.l.b16 %v28
  %v58 = vunpack.c.h.b16 %v28
  %v59 = vunpack.c.l.b16 %v29
  %v60 = vunpack.c.h.b16 %v29
  %v61 = vunpack.c.l.b16 %v30
  %v62 = vunpack.c.h.b16 %v30
  %v63 = vunpack.c.l.b16 %v31
  %v64 = vunpack.c.h.b16 %v31
  %v65 = vunpack.c.l.b16 %v32
  %v66 = vunpack.c.h.b16 %v32
  %v67 = vunpack.c.l.b16 %v33
  %v68 = vunpack.c.h.b16 %v33
  %v69 = vunpack.c.l.b16 %v34
  %v70 = vunpack.c.h.b16 %v34
  %v71 = vpack.c.b16 %v57, %v55
  %v72 = vpack.c.b16 %v58, %v56
  %v73 = vpack.c.b16 %v61, %v59
  %v74 = vpack.c.b16 %v62, %v60
  %v75 = vpack.c.b16 %v65, %v63
  %v76 = vpack.c.b16 %v66, %v64
  %v77 = vpack.c.b16 %v69, %v67
  %v78 = vpack.c.b16 %v70, %v68
  %vm87 = vcmask 523264
  %v89 = vsel %vm87, %v23, 0
  %v92 = vsel %vm87, %v24, 0
  %v95 = vsel %vm87, %v25, 0
  %v98 = vsel %vm87, %v26, 0
  %100 = vmatprep.subr.bf16.mxu0 %v72
  %101 = vmatpush1.bf16.msra.mxu0 %v71
  %102 = vmatprep.subr.bf16.mxu0 %v74
  %103 = vmatpush1.bf16.msra.mxu0 %v73
  %104 = vmatprep.subr.bf16.mxu0 %v76
  %105 = vmatpush1.bf16.msra.mxu0 %v75
  %106 = vmatprep.subr.bf16.mxu0 %v78
  %107 = vmatpush1.bf16.msra.mxu0 %v77
  %108 = vmatprep.subr.bf16.mxu0 0
  %109 = vmatpush1.bf16.msra.mxu0 0
  %110 = vmatprep.subr.bf16.mxu0 0
  %111 = vmatpush1.bf16.msra.mxu0 0
  %112 = vmatprep.subr.bf16.mxu0 0
  %113 = vmatpush1.bf16.msra.mxu0 0
  %114 = vmatprep.subr.bf16.mxu0 0
  %115 = vmatpush1.bf16.msra.mxu0 0
  %116 = vmatprep.subr.bf16.mxu0 0
  %117 = vmatpush1.bf16.msra.mxu0 0
  %118 = vmatprep.subr.bf16.mxu0 0
  %119 = vmatpush1.bf16.msra.mxu0 0
  %120 = vmatprep.subr.bf16.mxu0 0
  %121 = vmatpush1.bf16.msra.mxu0 0
  %122 = vmatprep.subr.bf16.mxu0 0
  %123 = vmatpush1.bf16.msra.mxu0 0
  %124 = vmatprep.subr.bf16.mxu0 0
  %125 = vmatpush1.bf16.msra.mxu0 0
  %126 = vmatprep.subr.bf16.mxu0 0
  %127 = vmatpush1.bf16.msra.mxu0 0
  %128 = vmatprep.subr.bf16.mxu0 0
  %129 = vmatpush1.bf16.msra.mxu0 0
  %130 = vmatprep.subr.bf16.mxu0 0
  %131 = vmatpush1.bf16.msra.mxu0 0
  %132 = vmatprep.mubr.bf16.mxu0 0
  %133 = vmatmul.mubr.bf16.gmra.mrb[0].mxu0 %v89
  %v134 = vpop.f32.mrb[0].mxu0
  %v135 = vadd.f32 %v40, %v134
  %v136 = vpop.f32.mrb[0].mxu0
  %v137 = vadd.f32 %v44, %v136
  %v138 = vpop.f32.mrb[0].mxu0
  %v139 = vadd.f32 %v40, %v138
  %v140 = vpop.f32.mrb[0].mxu0
  %v141 = vadd.f32 %v44, %v140
  %142 = vmatprep.mubr.bf16.mxu0 0
  %143 = vmatmul.mubr.bf16.gmra.mrb[0].mxu0 %v92
  %v144 = vpop.f32.mrb[0].mxu0
  %v145 = vadd.f32 %v40, %v144
  %v146 = vpop.f32.mrb[0].mxu0
  %v147 = vadd.f32 %v44, %v146
  %v148 = vpop.f32.mrb[0].mxu0
  %v149 = vadd.f32 %v40, %v148
  %v150 = vpop.f32.mrb[0].mxu0
  %v151 = vadd.f32 %v44, %v150
  %152 = vmatprep.mubr.bf16.mxu0 0
  %153 = vmatmul.mubr.bf16.gmra.mrb[0].mxu0 %v95
  %v154 = vpop.f32.mrb[0].mxu0
  %v155 = vadd.f32 %v40, %v154
  %v156 = vpop.f32.mrb[0].mxu0
  %v157 = vadd.f32 %v44, %v156
  %v158 = vpop.f32.mrb[0].mxu0
  %v159 = vadd.f32 %v40, %v158
  %v160 = vpop.f32.mrb[0].mxu0
  %v161 = vadd.f32 %v44, %v160
  %162 = vmatprep.mubr.bf16.mxu0 0
  %163 = vmatmul.mubr.bf16.gmra.mrb[0].mxu0 %v98
  %v164 = vpop.f32.mrb[0].mxu0
  %v165 = vadd.f32 %v40, %v164
  %v166 = vpop.f32.mrb[0].mxu0
  %v167 = vadd.f32 %v44, %v166
  %v168 = vpop.f32.mrb[0].mxu0
  %v169 = vadd.f32 %v40, %v168
  %v170 = vpop.f32.mrb[0].mxu0
  %v171 = vadd.f32 %v44, %v170
  %172 = vdwg.mxu0
  %173 = vst [vmem:[%s3] sm:$0xff] %v135
  %174 = vst [vmem:[%s3 + $0x8] sm:$0xff] %v137
  %175 = vst [vmem:[%s3 + $0x10] sm:$0xff] %v139
  %176 = vst [vmem:[%s3 + $0x18] sm:$0xff] %v141
  %177 = vst [vmem:[%s3 + $0x20] sm:$0xff] %v145
  %178 = vst [vmem:[%s3 + $0x28] sm:$0xff] %v147
  %179 = vst [vmem:[%s3 + $0x30] sm:$0xff] %v149
  %180 = vst [vmem:[%s3 + $0x38] sm:$0xff] %v151
  %181 = vst [vmem:[%s3 + $0x40] sm:$0xff] %v155
  %182 = vst [vmem:[%s3 + $0x48] sm:$0xff] %v157
  %183 = vst [vmem:[%s3 + $0x50] sm:$0xff] %v159
  %184 = vst [vmem:[%s3 + $0x58] sm:$0xff] %v161
  %185 = vst [vmem:[%s3 + $0x60] sm:$0xff] %v165
  %186 = vst [vmem:[%s3 + $0x68] sm:$0xff] %v167
  %187 = vst [vmem:[%s3 + $0x70] sm:$0xff] %v169
  %188 = vst [vmem:[%s3 + $0x78] sm:$0xff] %v171
  // Predicated region
  $region14: #{lstm_crf_forward.7} parent=0 // pred_check
    _
  $region15: #{lstm_crf_forward.7} parent=0 // pred_check_branch
    %190 = sbr.rel (0) target = $region17
  $region16: #{lstm_crf_forward.7} parent=0 // pred_region
    _
  $region17: #{lstm_crf_forward.7} parent=0 // pred_fallthru
    _
  // Predicated region
  $region18: #{lstm_crf_forward.7} parent=0 // pred_check
    _
  $region19: #{lstm_crf_forward.7} parent=0 // pred_check_branch
    %192 = sbr.rel (0) target = $region21
  $region20: #{lstm_crf_forward.7} parent=0 // pred_region
    _
  $region21: #{lstm_crf_forward.7} parent=0 // pred_fallthru
    _

// kernel: lstm_crf_forward.9
$region0: #{lstm_crf_forward.9}
  #allocation0 [shape = 'u32[]', space=smem, size = 0x4, offset = 0x4, fixed_abs, tag = 'smem constant byte address 0x4 - core index']
  #allocation1 [shape = 'u32[144,128]{1,0:T(1,128)}', space=vmem, size = 0x12000, scoped, tag = 'internal scratch']
  %s0 = inlined_call_operand.vmem [shape: f32[64,64], index: 0, kind: input, shape index: {}]
  %s1 = inlined_call_operand.vmem [shape: bf16[64,2], index: 1, kind: input, shape index: {}]
  %s2 = inlined_call_operand.vmem [shape: f32[1,2], index: 2, kind: input, shape index: {}]
  %s3 = inlined_call_operand.vmem [shape: f32[64,2], index: 3, kind: output, shape index: {}]
  %s4 = sld [smem:[#allocation0]]
  $region22: #{lstm_crf_forward.9} parent=0
    _
  %s6 = ssub.s32 1, %s4
  %s7 = scalar_select 0, %s6, %s4
  // Predicated region
  $region2: #{lstm_crf_forward.9} parent=0 // pred_check
    _
  $region3: #{lstm_crf_forward.9} parent=0 // pred_check_branch
    %9 = sbr.rel (0) target = $region5
  $region4: #{lstm_crf_forward.9} parent=0 // pred_region
    _
  $region5: #{lstm_crf_forward.9} parent=0 // pred_fallthru
    _
  // Predicated region
  $region6: #{lstm_crf_forward.9} parent=0 // pred_check
    _
  $region7: #{lstm_crf_forward.9} parent=0 // pred_check_branch
    %11 = sbr.rel (0) target = $region9
  $region8: #{lstm_crf_forward.9} parent=0 // pred_region
    _
  $region9: #{lstm_crf_forward.9} parent=0 // pred_fallthru
    _
  // Predicated region
  $region10: #{lstm_crf_forward.9} parent=0 // pred_check
    _
  $region11: #{lstm_crf_forward.9} parent=0 // pred_check_branch
    %13 = sbr.rel (0) target = $region13
  $region12: #{lstm_crf_forward.9} parent=0 // pred_region
    _
  $region13: #{lstm_crf_forward.9} parent=0 // pred_fallthru
    _
  %v15 = vld [vmem:[%s0] sm:$0xff]
  %v16 = vld [vmem:[%s0 + $0x8] sm:$0xff]
  %v17 = vld [vmem:[%s0 + $0x10] sm:$0xff]
  %v18 = vld [vmem:[%s0 + $0x18] sm:$0xff]
  %v19 = vld [vmem:[%s0 + $0x20] sm:$0xff]
  %v20 = vld [vmem:[%s0 + $0x28] sm:$0xff]
  %v21 = vld [vmem:[%s0 + $0x30] sm:$0xff]
  %v22 = vld [vmem:[%s0 + $0x38] sm:$0xff]
  %v23 = vpack.c.bf16 %v16, %v15
  %v24 = vpack.c.bf16 %v18, %v17
  %v25 = vpack.c.bf16 %v20, %v19
  %v26 = vpack.c.bf16 %v22, %v21
  %v27 = vld [vmem:[%s1] sm:$0xf]
  %v28 = vld [vmem:[%s1 + $0x4] sm:$0xf]
  %v29 = vld [vmem:[%s1 + $0x8] sm:$0xf]
  %v30 = vld [vmem:[%s1 + $0xc] sm:$0xf]
  %v31 = vld [vmem:[%s1 + $0x10] sm:$0xf]
  %v32 = vld [vmem:[%s1 + $0x14] sm:$0xf]
  %v33 = vld [vmem:[%s1 + $0x18] sm:$0xf]
  %v34 = vld [vmem:[%s1 + $0x1c] sm:$0xf]
  %v35 = vld [vmem:[%s2] sm:$0x1]
  %v37 = vlaneseq
  %v38 = vshrl.u32 %v37, 7
  %v39 = vsub.s32 0, %v38
  %v40 = vrot.slane %v35, %v39
  %v50 = vunpack.c.l.b16 %v27
  %v51 = vunpack.c.l.b16 %v28
  %v52 = vunpack.c.l.b16 %v29
  %v53 = vunpack.c.l.b16 %v30
  %v54 = vunpack.c.l.b16 %v31
  %v55 = vunpack.c.l.b16 %v32
  %v56 = vunpack.c.l.b16 %v33
  %v57 = vunpack.c.l.b16 %v34
  %v58 = vpack.c.b16 %v51, %v50
  %v59 = vpack.c.b16 %v53, %v52
  %v60 = vpack.c.b16 %v55, %v54
  %v61 = vpack.c.b16 %v57, %v56
  %vm66 = vcmask 523264
  %v68 = vsel %vm66, %v23, 0
  %v71 = vsel %vm66, %v24, 0
  %v74 = vsel %vm66, %v25, 0
  %v77 = vsel %vm66, %v26, 0
  %79 = vmatprep.subr.bf16.mxu0 0
  %80 = vmatpush1.bf16.msra.mxu0 %v58
  %81 = vmatprep.subr.bf16.mxu0 0
  %82 = vmatpush1.bf16.msra.mxu0 %v59
  %83 = vmatprep.subr.bf16.mxu0 0
  %84 = vmatpush1.bf16.msra.mxu0 %v60
  %85 = vmatprep.subr.bf16.mxu0 0
  %86 = vmatpush1.bf16.msra.mxu0 %v61
  %87 = vmatprep.subr.bf16.mxu0 0
  %88 = vmatpush1.bf16.msra.mxu0 0
  %89 = vmatprep.subr.bf16.mxu0 0
  %90 = vmatpush1.bf16.msra.mxu0 0
  %91 = vmatprep.subr.bf16.mxu0 0
  %92 = vmatpush1.bf16.msra.mxu0 0
  %93 = vmatprep.subr.bf16.mxu0 0
  %94 = vmatpush1.bf16.msra.mxu0 0
  %95 = vmatprep.subr.bf16.mxu0 0
  %96 = vmatpush1.bf16.msra.mxu0 0
  %97 = vmatprep.subr.bf16.mxu0 0
  %98 = vmatpush1.bf16.msra.mxu0 0
  %99 = vmatprep.subr.bf16.mxu0 0
  %100 = vmatpush1.bf16.msra.mxu0 0
  %101 = vmatprep.subr.bf16.mxu0 0
  %102 = vmatpush1.bf16.msra.mxu0 0
  %103 = vmatprep.subr.bf16.mxu0 0
  %104 = vmatpush1.bf16.msra.mxu0 0
  %105 = vmatprep.subr.bf16.mxu0 0
  %106 = vmatpush1.bf16.msra.mxu0 0
  %107 = vmatprep.subr.bf16.mxu0 0
  %108 = vmatpush1.bf16.msra.mxu0 0
  %109 = vmatprep.subr.bf16.mxu0 0
  %110 = vmatpush1.bf16.msra.mxu0 0
  %111 = vmatprep.mubr.bf16.mxu0 0
  %112 = vmatmul.mubr.bf16.gmra.mrb[0].mxu0 %v68
  %v113 = vpop.f32.mrb[0].mxu0
  %v114 = vadd.f32 %v40, %v113
  %v115 = vpop.f32.mrb[0].mxu0
  %v116 = vpop.f32.mrb[0].mxu0
  %v117 = vadd.f32 %v40, %v116
  %v118 = vpop.f32.mrb[0].mxu0
  %119 = vmatprep.mubr.bf16.mxu0 0
  %120 = vmatmul.mubr.bf16.gmra.mrb[0].mxu0 %v71
  %v121 = vpop.f32.mrb[0].mxu0
  %v122 = vadd.f32 %v40, %v121
  %v123 = vpop.f32.mrb[0].mxu0
  %v124 = vpop.f32.mrb[0].mxu0
  %v125 = vadd.f32 %v40, %v124
  %v126 = vpop.f32.mrb[0].mxu0
  %127 = vmatprep.mubr.bf16.mxu0 0
  %128 = vmatmul.mubr.bf16.gmra.mrb[0].mxu0 %v74
  %v129 = vpop.f32.mrb[0].mxu0
  %v130 = vadd.f32 %v40, %v129
  %v131 = vpop.f32.mrb[0].mxu0
  %v132 = vpop.f32.mrb[0].mxu0
  %v133 = vadd.f32 %v40, %v132
  %v134 = vpop.f32.mrb[0].mxu0
  %135 = vmatprep.mubr.bf16.mxu0 0
  %136 = vmatmul.mubr.bf16.gmra.mrb[0].mxu0 %v77
  %v137 = vpop.f32.mrb[0].mxu0
  %v138 = vadd.f32 %v40, %v137
  %v139 = vpop.f32.mrb[0].mxu0
  %v140 = vpop.f32.mrb[0].mxu0
  %v141 = vadd.f32 %v40, %v140
  %v142 = vpop.f32.mrb[0].mxu0
  %143 = vdwg.mxu0
  %152 = vrot.lane.b32.xlu0 %v114, 1
  %v153 = vpop.permute.xlu0 %152
  %154 = vrot.lane.b32.xlu0 %v117, 1
  %v155 = vpop.permute.xlu0 %154
  %156 = vrot.lane.b32.xlu0 %v122, 1
  %v157 = vpop.permute.xlu0 %156
  %158 = vrot.lane.b32.xlu0 %v125, 1
  %v159 = vpop.permute.xlu0 %158
  %160 = vrot.lane.b32.xlu0 %v130, 1
  %v161 = vpop.permute.xlu0 %160
  %162 = vrot.lane.b32.xlu0 %v133, 1
  %v163 = vpop.permute.xlu0 %162
  %164 = vrot.lane.b32.xlu0 %v138, 1
  %v165 = vpop.permute.xlu0 %164
  %166 = vrot.lane.b32.xlu0 %v141, 1
  %v167 = vpop.permute.xlu0 %166
  %v176 = vsub.f32 %v114, %v153
  %v177 = vsub.f32 %v117, %v155
  %v178 = vsub.f32 %v122, %v157
  %v179 = vsub.f32 %v125, %v159
  %v180 = vsub.f32 %v130, %v161
  %v181 = vsub.f32 %v133, %v163
  %v182 = vsub.f32 %v138, %v165
  %v183 = vsub.f32 %v141, %v167
  %v184 = vxor.u32 %v176, 2147483648
  %v185 = vxor.u32 %v177, 2147483648
  %v186 = vxor.u32 %v178, 2147483648
  %v187 = vxor.u32 %v179, 2147483648
  %v188 = vxor.u32 %v180, 2147483648
  %v189 = vxor.u32 %v181, 2147483648
  %v190 = vxor.u32 %v182, 2147483648
  %v191 = vxor.u32 %v183, 2147483648
  %v192 = vmul.f32 %v184, 1.442695
  %v193 = vpow.pop %v192
  %v194 = vmul.f32 %v185, 1.442695
  %v195 = vpow.pop %v194
  %v196 = vmul.f32 %v186, 1.442695
  %v197 = vpow.pop %v196
  %v198 = vmul.f32 %v187, 1.442695
  %v199 = vpow.pop %v198
  %v200 = vmul.f32 %v188, 1.442695
  %v201 = vpow.pop %v200
  %v202 = vmul.f32 %v189, 1.442695
  %v203 = vpow.pop %v202
  %v204 = vmul.f32 %v190, 1.442695
  %v205 = vpow.pop %v204
  %v206 = vmul.f32 %v191, 1.442695
  %v207 = vpow.pop %v206
  %v208 = vadd.f32 %v193, 1.0
  %v209 = vadd.f32 %v195, 1.0
  %v210 = vadd.f32 %v197, 1.0
  %v211 = vadd.f32 %v199, 1.0
  %v212 = vadd.f32 %v201, 1.0
  %v213 = vadd.f32 %v203, 1.0
  %v214 = vadd.f32 %v205, 1.0
  %v215 = vadd.f32 %v207, 1.0
  %v216 = vrcp.pop %v208
  %v217 = vmul.f32 1.0, %v216
  %v218 = vrcp.pop %v209
  %v219 = vmul.f32 1.0, %v218
  %v220 = vrcp.pop %v210
  %v221 = vmul.f32 1.0, %v220
  %v222 = vrcp.pop %v211
  %v223 = vmul.f32 1.0, %v222
  %v224 = vrcp.pop %v212
  %v225 = vmul.f32 1.0, %v224
  %v226 = vrcp.pop %v213
  %v227 = vmul.f32 1.0, %v226
  %v228 = vrcp.pop %v214
  %v229 = vmul.f32 1.0, %v228
  %v230 = vrcp.pop %v215
  %v231 = vmul.f32 1.0, %v230
  %v232 = vsub.f32 1.0, %v217
  %v233 = vsub.f32 1.0, %v219
  %v234 = vsub.f32 1.0, %v221
  %v235 = vsub.f32 1.0, %v223
  %v236 = vsub.f32 1.0, %v225
  %v237 = vsub.f32 1.0, %v227
  %v238 = vsub.f32 1.0, %v229
  %v239 = vsub.f32 1.0, %v231
  %248 = vrot.lane.b32.xlu0 %v232, 127
  %v249 = vpop.permute.xlu0 %248
  %250 = vrot.lane.b32.xlu0 %v233, 127
  %v251 = vpop.permute.xlu0 %250
  %252 = vrot.lane.b32.xlu0 %v234, 127
  %v253 = vpop.permute.xlu0 %252
  %254 = vrot.lane.b32.xlu0 %v235, 127
  %v255 = vpop.permute.xlu0 %254
  %256 = vrot.lane.b32.xlu0 %v236, 127
  %v257 = vpop.permute.xlu0 %256
  %258 = vrot.lane.b32.xlu0 %v237, 127
  %v259 = vpop.permute.xlu0 %258
  %260 = vrot.lane.b32.xlu0 %v238, 127
  %v261 = vpop.permute.xlu0 %260
  %262 = vrot.lane.b32.xlu0 %v239, 127
  %v263 = vpop.permute.xlu0 %262
  %vm272 = vcmask 7168
  %v273 = vsel %vm272, %v249, %v217
  %v274 = vsel %vm272, %v251, %v219
  %v275 = vsel %vm272, %v253, %v221
  %v276 = vsel %vm272, %v255, %v223
  %v277 = vsel %vm272, %v257, %v225
  %v278 = vsel %vm272, %v259, %v227
  %v279 = vsel %vm272, %v261, %v229
  %v280 = vsel %vm272, %v263, %v231
  %vm281 = vcmask 15360
  %282 = vst.msk [vmem:[%s3] sm:$0xff] %vm281, %v273
  %283 = vst.msk [vmem:[%s3 + $0x8] sm:$0xff] %vm281, %v274
  %284 = vst.msk [vmem:[%s3 + $0x10] sm:$0xff] %vm281, %v275
  %285 = vst.msk [vmem:[%s3 + $0x18] sm:$0xff] %vm281, %v276
  %286 = vst.msk [vmem:[%s3 + $0x20] sm:$0xff] %vm281, %v277
  %287 = vst.msk [vmem:[%s3 + $0x28] sm:$0xff] %vm281, %v278
  %288 = vst.msk [vmem:[%s3 + $0x30] sm:$0xff] %vm281, %v279
  %289 = vst.msk [vmem:[%s3 + $0x38] sm:$0xff] %vm281, %v280
  // Predicated region
  $region14: #{lstm_crf_forward.9} parent=0 // pred_check
    _
  $region15: #{lstm_crf_forward.9} parent=0 // pred_check_branch
    %291 = sbr.rel (0) target = $region17
  $region16: #{lstm_crf_forward.9} parent=0 // pred_region
    _
  $region17: #{lstm_crf_forward.9} parent=0 // pred_fallthru
    _
  // Predicated region
  $region18: #{lstm_crf_forward.9} parent=0 // pred_check
    _
  $region19: #{lstm_crf_forward.9} parent=0 // pred_check_branch
    %293 = sbr.rel (0) target = $region21
  $region20: #{lstm_crf_forward.9} parent=0 // pred_region
    _
  $region21: #{lstm_crf_forward.9} parent=0 // pred_fallthru
    _

</llo_original>
